<compile_context>
chip_gen: v7x
topology: tpu7x:2x2x1
jax: 0.10.0
libtpu: 0.0.40
codegen_flags: <defaults>
</compile_context>

<pallas_src>
import functools

import jax
import jax.numpy as jnp
from jax.experimental import pallas as pl
from jax.experimental.pallas import tpu as pltpu


# Default rows per M tile.  For K=32, N=64 in f32 this is
# 2 (double buffer) * 2048 * (32 + 64) * 4 B ~= 1.5 MiB of VMEM plus the
# resident 8 KiB weight — comfortably inside v7x's 32 MiB scoped default.
_DEFAULT_TM = 2048


def _round_up(x, m):
    return (x + m - 1) // m * m


def _value_encoder_kernel(x_ref, w_ref, b_ref, o_ref):
    # Hot path: MXU matmul with f32 accumulation, bias broadcast + ReLU on VPU.
    acc = jnp.dot(x_ref[...], w_ref[...], preferred_element_type=jnp.float32)
    acc = acc + b_ref[...].astype(jnp.float32)          # (TM, N) + (1, N)
    o_ref[...] = jnp.maximum(acc, 0.0).astype(o_ref.dtype)


@functools.partial(jax.jit, static_argnames=("tm",))
def value_encoder_forward(x, w_t, b, *, tm=_DEFAULT_TM):
    """relu(x @ w_t + b).

    x:   (M, K)  activations, M a multiple of 8 (wrapper pads)
    w_t: (K, N)  pre-transposed weight (kept resident in VMEM)
    b:   (1, N)  bias
    returns (M, N) in x.dtype.
    """
    M, K = x.shape
    K2, N = w_t.shape
    assert K == K2 and b.shape == (1, N)
    assert M % 8 == 0, "wrapper must pad M to a multiple of 8"

    # Tile over M so Pallas double-buffers the x / y streams.
    tm = min(tm, M)
    grid_m = pl.cdiv(M, tm)

    out_dtype = x.dtype
    bytes_per = jnp.dtype(out_dtype).itemsize
    cost = pl.CostEstimate(
        flops=2 * M * K * N,
        transcendentals=0,
        bytes_accessed=(M * K + K * N + N + M * N) * bytes_per,
    )

    return pl.pallas_call(
        _value_encoder_kernel,
        out_shape=jax.ShapeDtypeStruct((M, N), out_dtype),
        grid_spec=pl.GridSpec(
            grid=(grid_m,),
            in_specs=[
                pl.BlockSpec((tm, K), lambda i: (i, 0)),   # stream x row-tiles
                pl.BlockSpec((K, N), lambda i: (0, 0)),    # weight resident
                pl.BlockSpec((1, N), lambda i: (0, 0)),    # bias resident
            ],
            out_specs=pl.BlockSpec((tm, N), lambda i: (i, 0)),
        ),
        compiler_params=pltpu.CompilerParams(
            # Independent M tiles -> shard across both TensorCores on v7x.
            dimension_semantics=("parallel",),
        ),
        cost_estimate=cost,
    )(x, w_t, b)


def prepare_value_encoder_params(weight, bias, dtype=None):
    """One-time parameter prep (hoisted out of the hot path).

    weight: (out_dim, in_dim)  -- nn.Linear convention
    bias:   (out_dim,)
    Returns (w_t, b2d) with w_t: (in_dim, out_dim), b2d: (1, out_dim).
    """
    w_t = weight.T
    b2d = bias.reshape(1, -1)
    if dtype is not None:
        w_t = w_t.astype(dtype)
        b2d = b2d.astype(dtype)
    return w_t, b2d


def value_encoder_apply(value_embedding, w_t, b2d):
    """Matches ValueEncoder.forward: relu(linear(value_embedding)).

    value_embedding: (..., in_dim), any float dtype (preserved; bf16 halves HBM
                     traffic on v6e/v7x).
    w_t:  (in_dim, out_dim)  from prepare_value_encoder_params
    b2d:  (1, out_dim)
    """
    in_dim = value_embedding.shape[-1]
    out_dim = w_t.shape[1]
    lead = value_embedding.shape[:-1]

    x2d = value_embedding.reshape(-1, in_dim)
    m = x2d.shape[0]

    # Pad rows to a multiple of 8 (f32 sublane) so every block is well-formed.
    m_pad = _round_up(max(m, 1), 8)
    if m_pad != m:
        x2d = jnp.pad(x2d, ((0, m_pad - m), (0, 0)))

    y2d = value_encoder_forward(x2d, w_t.astype(x2d.dtype), b2d.astype(x2d.dtype))
    if m_pad != m:
        y2d = y2d[:m]
    return y2d.reshape(*lead, out_dim)


if __name__ == "__main__":
    # Deterministic small example consistent with the module:
    # value_embedding: (batch=2, seq=8, in_dim=32), out_dim=64.
    key = jax.random.PRNGKey(0)
    k_x, k_w, k_b = jax.random.split(key, 3)

    batch, seq, in_dim, out_dim = 2, 8, 32, 64

    x = jax.random.normal(k_x, (batch, seq, in_dim), dtype=jnp.float32)
    # nn.Linear init shapes: weight (out_dim, in_dim), bias (out_dim,)
    weight = jax.random.normal(k_w, (out_dim, in_dim), dtype=jnp.float32) * 0.1
    bias = jax.random.normal(k_b, (out_dim,), dtype=jnp.float32) * 0.1

    # One-time param prep (weight transpose hoisted out of the hot path).
    w_t, b2d = prepare_value_encoder_params(weight, bias, dtype=jnp.float32)

    y = value_encoder_apply(x, w_t, b2d)
    y = jax.block_until_ready(y)

    # Reference check (plain JAX) to make sure semantics match.
    y_ref = jnp.maximum(jnp.einsum("bsi,oi->bso", x, weight) + bias, 0.0)
    assert y.shape == (batch, seq, out_dim)
    assert jnp.allclose(y, y_ref, atol=1e-5, rtol=1e-5)

    print("KERNEL_OK")
</pallas_src>

<mosaic_0001>
module attributes {stable_mosaic.version = 11 : i64} {
  func.func @_value_encoder_kernel(%arg0: i32, %arg1: memref<16x32xf32, #tpu.memory_space<vmem>>, %arg2: memref<32x64xf32, #tpu.memory_space<vmem>>, %arg3: memref<1x64xf32, #tpu.memory_space<vmem>>, %arg4: memref<16x64xf32, #tpu.memory_space<vmem>>) attributes {dimension_semantics = [#tpu.dimension_semantics<parallel>], iteration_bounds = array<i64: 1>, scalar_prefetch = 0 : i64, scratch_operands = 0 : i64, tpu.core_type = #tpu.core_type<tc>, window_params = [{transform_indices = @transform_0, window_bounds = array<i64: 16, 32>}, {pipeline_mode = #tpu.pipeline_mode<synchronous>, transform_indices = @transform_1, window_bounds = array<i64: 32, 64>}, {pipeline_mode = #tpu.pipeline_mode<synchronous>, transform_indices = @transform_2, window_bounds = array<i64: 1, 64>}, {transform_indices = @transform_3, window_bounds = array<i64: 16, 64>}]} {
    %c0 = arith.constant 0 : index
    %c0_0 = arith.constant 0 : index
    %0 = vector.load %arg1[%c0, %c0_0] : memref<16x32xf32, #tpu.memory_space<vmem>>, vector<16x32xf32>
    %c0_1 = arith.constant 0 : index
    %c0_2 = arith.constant 0 : index
    %1 = vector.load %arg2[%c0_1, %c0_2] : memref<32x64xf32, #tpu.memory_space<vmem>>, vector<32x64xf32>
    %cst = arith.constant dense<0.000000e+00> : vector<16x64xf32>
    %2 = tpu.matmul %0, %1, %cst {dimension_numbers = #tpu.dot_dimension_numbers<[1], [0], [0], [1], [0, 0, 1, 1], [], []>} : vector<16x32xf32>, vector<32x64xf32>, vector<16x64xf32> -> vector<16x64xf32>
    %c0_3 = arith.constant 0 : index
    %c0_4 = arith.constant 0 : index
    %3 = vector.load %arg3[%c0_3, %c0_4] : memref<1x64xf32, #tpu.memory_space<vmem>>, vector<1x64xf32>
    %4 = vector.broadcast %3 : vector<1x64xf32> to vector<16x64xf32>
    %5 = arith.addf %2, %4 : vector<16x64xf32>
    %cst_5 = arith.constant 0.000000e+00 : f32
    %6 = vector.broadcast %cst_5 : f32 to vector<16x64xf32>
    %7 = arith.maximumf %5, %6 : vector<16x64xf32>
    %c0_6 = arith.constant 0 : index
    %c0_7 = arith.constant 0 : index
    %8 = vector.load %arg4[%c0_6, %c0_7] : memref<16x64xf32, #tpu.memory_space<vmem>>, vector<16x64xf32>
    tpu.vector_store %arg4[%c0_6, %c0_7], %7 {strides = array<i32>} : memref<16x64xf32, #tpu.memory_space<vmem>>, vector<16x64xf32>,
    return
  }
  func.func @transform_0(%arg0: i32) -> (i32, i32) {
    %c0_i32 = arith.constant 0 : i32
    %c0_i32_0 = arith.constant 0 : i32
    return %arg0, %c0_i32 : i32, i32
  }
  func.func @transform_1(%arg0: i32) -> (i32, i32) {
    %c0_i32 = arith.constant 0 : i32
    %c0_i32_0 = arith.constant 0 : i32
    %c0_i32_1 = arith.constant 0 : i32
    return %c0_i32, %c0_i32_0 : i32, i32
  }
  func.func @transform_2(%arg0: i32) -> (i32, i32) {
    %c0_i32 = arith.constant 0 : i32
    %c0_i32_0 = arith.constant 0 : i32
    %c0_i32_1 = arith.constant 0 : i32
    return %c0_i32, %c0_i32_0 : i32, i32
  }
  func.func @transform_3(%arg0: i32) -> (i32, i32) {
    %c0_i32 = arith.constant 0 : i32
    %c0_i32_0 = arith.constant 0 : i32
    return %arg0, %c0_i32 : i32, i32
  }
}

</mosaic_0001>

<llo_original>
// kernel: value_encoder_forward.1
$region0: #{value_encoder_forward.1}
  #allocation0 [shape = 'u32[]', space=smem, size = 0x4, offset = 0x4, fixed_abs, tag = 'smem constant byte address 0x4 - core index']
  #allocation1 [shape = 'u32[144,128]{1,0:T(1,128)}', space=vmem, size = 0x12000, scoped, tag = 'internal scratch']
  %s0 = inlined_call_operand.hbm [shape: f32[16,32], index: 0, kind: input, shape index: {}]
  %s1 = inlined_call_operand.hbm [shape: f32[32,64], index: 1, kind: input, shape index: {}]
  %s2 = inlined_call_operand.vmem [shape: f32[1,64], index: 2, kind: input, shape index: {}]
  %s3 = inlined_call_operand.hbm [shape: f32[16,64], index: 3, kind: output, shape index: {}]
  %s4 = sld [smem:[#allocation0]]
  $region30: #{value_encoder_forward.1} parent=0
    _
  %s6 = ssub.s32 1, %s4
  %s7 = scalar_select 0, %s6, %s4
  $region1: #{value_encoder_forward.1} parent=0
    #allocation2 [shape = 'u8[8192]{0}', space=vmem, size = 0x2000, scoped, tag = 'input window, operand 0, single buffered']
    #allocation3 [shape = 's32[1]{0}', space=sflag, size = 0x4, scoped, tag = 'scoped memory for value_encoder_forward.1']
    #allocation4 [shape = 's32[1]{0}', space=sflag, size = 0x4, scoped, tag = 'scoped memory for value_encoder_forward.1']
    #allocation5 [shape = 'u8[16384]{0}', space=vmem, size = 0x4000, scoped, tag = 'input window, operand 1, single buffered']
    #allocation6 [shape = 's32[1]{0}', space=sflag, size = 0x4, scoped, tag = 'scoped memory for value_encoder_forward.1']
    #allocation7 [shape = 'u8[8192]{0}', space=vmem, size = 0x2000, scoped, tag = 'output window, operand 0, single buffered']
    %8 = vsyncpa [#allocation3], 0
    %9 = vsyncpa [#allocation6], 0
    %10 = vsyncpa [#allocation4], 0
    // Predicated region
    $region2: #{value_encoder_forward.1} parent=1 // pred_check
      _
    $region3: #{value_encoder_forward.1} parent=1 // pred_check_branch
      %12 = sbr.rel (0) target = $region5
    $region4: #{value_encoder_forward.1} parent=1 // pred_region
      %s14 = ssub.s32 256, 256
      %15 = vsyncadd [#allocation3], %s14
      %s16 = sshll.u32 [#allocation2], 4
      %s17 = int_to_ptr.vmem [resolvable:$true] %s16
      %22 = dma.hbm_to_vmem [thread:$0]  %s0, 256, %s17, [#allocation3], 128, 128, 8
    $region5: #{value_encoder_forward.1} parent=1 // pred_fallthru
      _
    // Predicated region
    $region6: #{value_encoder_forward.1} parent=1 // pred_check
      _
    $region7: #{value_encoder_forward.1} parent=1 // pred_check_branch
      %24 = sbr.rel (0) target = $region9
    $region8: #{value_encoder_forward.1} parent=1 // pred_region
      %s26 = ssub.s32 512, 512
      %27 = vsyncadd [#allocation6], %s26
      %s28 = sshll.u32 [#allocation5], 4
      %s29 = int_to_ptr.vmem [resolvable:$true] %s28
      %34 = dma.hbm_to_vmem [thread:$0]  %s1, 512, %s29, [#allocation6], 128, 128, 8
    $region9: #{value_encoder_forward.1} parent=1 // pred_fallthru
      _
    // Predicated region
    $region10: #{value_encoder_forward.1} parent=1 // pred_check
      _
    $region11: #{value_encoder_forward.1} parent=1 // pred_check_branch
      %36 = sbr.rel (0) target = $region13
    $region12: #{value_encoder_forward.1} parent=1 // pred_region
      _
    $region13: #{value_encoder_forward.1} parent=1 // pred_fallthru
      _
    // Predicated region
    $region14: #{value_encoder_forward.1} parent=1 // pred_check
      _
    $region15: #{value_encoder_forward.1} parent=1 // pred_check_branch
      %38 = sbr.rel (0) target = $region17
    $region16: #{value_encoder_forward.1} parent=1 // pred_region
      %39 = dma.done [#allocation3], 256
    $region17: #{value_encoder_forward.1} parent=1 // pred_fallthru
      _
    // Predicated region
    $region18: #{value_encoder_forward.1} parent=1 // pred_check
      _
    $region19: #{value_encoder_forward.1} parent=1 // pred_check_branch
      %41 = sbr.rel (0) target = $region21
    $region20: #{value_encoder_forward.1} parent=1 // pred_region
      %42 = dma.done [#allocation6], 512
    $region21: #{value_encoder_forward.1} parent=1 // pred_fallthru
      _
    %v43 = vld [vmem:[#allocation2] sm:$0xff]
    %v44 = vld [vmem:[#allocation2 + $0x8] sm:$0xff]
    %v45 = vld [vmem:[#allocation5] sm:$0xff]
    %v46 = vld [vmem:[#allocation5 + $0x8] sm:$0xff]
    %v47 = vld [vmem:[#allocation5 + $0x10] sm:$0xff]
    %v48 = vld [vmem:[#allocation5 + $0x18] sm:$0xff]
    %v49 = vld [vmem:[%s2] sm:$0x1]
    %v51 = vlaneseq
    %v52 = vshrl.u32 %v51, 7
    %v53 = vsub.s32 0, %v52
    %v54 = vrot.slane %v49, %v53
    %vm56 = vcmask 261120
    %v58 = vsel %vm56, %v43, 0
    %v61 = vsel %vm56, %v44, 0
    %63 = vmatprep.subr.mxu0 0.0
    %64 = vmatpush1.msra.mxu0 %v45
    %65 = vmatprep.subr.mxu0 0.0
    %66 = vmatpush1.msra.mxu0 %v46
    %67 = vmatprep.subr.mxu0 0.0
    %68 = vmatpush1.msra.mxu0 %v47
    %69 = vmatprep.subr.mxu0 0.0
    %70 = vmatpush1.msra.mxu0 %v48
    %71 = vmatprep.subr.mxu0 0.0
    %72 = vmatpush1.msra.mxu0 0.0
    %73 = vmatprep.subr.mxu0 0.0
    %74 = vmatpush1.msra.mxu0 0.0
    %75 = vmatprep.subr.mxu0 0.0
    %76 = vmatpush1.msra.mxu0 0.0
    %77 = vmatprep.subr.mxu0 0.0
    %78 = vmatpush1.msra.mxu0 0.0
    %79 = vmatprep.subr.mxu0 0.0
    %80 = vmatpush1.msra.mxu0 0.0
    %81 = vmatprep.subr.mxu0 0.0
    %82 = vmatpush1.msra.mxu0 0.0
    %83 = vmatprep.subr.mxu0 0.0
    %84 = vmatpush1.msra.mxu0 0.0
    %85 = vmatprep.subr.mxu0 0.0
    %86 = vmatpush1.msra.mxu0 0.0
    %87 = vmatprep.subr.mxu0 0.0
    %88 = vmatpush1.msra.mxu0 0.0
    %89 = vmatprep.subr.mxu0 0.0
    %90 = vmatpush1.msra.mxu0 0.0
    %91 = vmatprep.subr.mxu0 0.0
    %92 = vmatpush1.msra.mxu0 0.0
    %93 = vmatprep.subr.mxu0 0.0
    %94 = vmatpush1.msra.mxu0 0.0
    %95 = vmatprep.subr.mxu0 0.0
    %96 = vmatpush1.msra.mxu0 0.0
    %97 = vmatprep.subr.mxu0 0.0
    %98 = vmatpush1.msra.mxu0 0.0
    %99 = vmatprep.subr.mxu0 0.0
    %100 = vmatpush1.msra.mxu0 0.0
    %101 = vmatprep.subr.mxu0 0.0
    %102 = vmatpush1.msra.mxu0 0.0
    %103 = vmatprep.subr.mxu0 0.0
    %104 = vmatpush1.msra.mxu0 0.0
    %105 = vmatprep.subr.mxu0 0.0
    %106 = vmatpush1.msra.mxu0 0.0
    %107 = vmatprep.subr.mxu0 0.0
    %108 = vmatpush1.msra.mxu0 0.0
    %109 = vmatprep.subr.mxu0 0.0
    %110 = vmatpush1.msra.mxu0 0.0
    %111 = vmatprep.subr.mxu0 0.0
    %112 = vmatpush1.msra.mxu0 0.0
    %113 = vmatprep.subr.mxu0 0.0
    %114 = vmatpush1.msra.mxu0 0.0
    %115 = vmatprep.subr.mxu0 0.0
    %116 = vmatpush1.msra.mxu0 0.0
    %117 = vmatprep.subr.mxu0 0.0
    %118 = vmatpush1.msra.mxu0 0.0
    %119 = vmatprep.subr.mxu0 0.0
    %120 = vmatpush1.msra.mxu0 0.0
    %121 = vmatprep.subr.mxu0 0.0
    %122 = vmatpush1.msra.mxu0 0.0
    %123 = vmatprep.subr.mxu0 0.0
    %124 = vmatpush1.msra.mxu0 0.0
    %125 = vmatprep.subr.mxu0 0.0
    %126 = vmatpush1.msra.mxu0 0.0
    %127 = vmatprep.mubr.f32.mxu0 0.0
    %128 = vmatmul.mubr.f32.gmra.mrb[0].mxu0 %v58
    %v129 = vpop.f32.mrb[0].mxu0
    %v130 = vadd.f32 %v54, %v129
    %v131 = vpop.f32.mrb[0].mxu0
    %132 = vmatprep.mubr.f32.mxu0 0.0
    %133 = vmatmul.mubr.f32.gmra.mrb[0].mxu0 %v61
    %v134 = vpop.f32.mrb[0].mxu0
    %v135 = vadd.f32 %v54, %v134
    %v136 = vpop.f32.mrb[0].mxu0
    %137 = vdwg.mxu0
    %v138 = vmax.f32 %v130, 0.0
    %v139 = vmax.f32 %v135, 0.0
    %vm140 = vcmask 523264
    %141 = vst.msk [vmem:[#allocation7] sm:$0xff] %vm140, %v138
    %142 = vst.msk [vmem:[#allocation7 + $0x8] sm:$0xff] %vm140, %v139
    // Predicated region
    $region22: #{value_encoder_forward.1} parent=1 // pred_check
      _
    $region23: #{value_encoder_forward.1} parent=1 // pred_check_branch
      %144 = sbr.rel (0) target = $region25
    $region24: #{value_encoder_forward.1} parent=1 // pred_region
      %s146 = ssub.s32 256, 256
      %147 = vsyncadd [#allocation4], %s146
      %s148 = sshll.u32 [#allocation7], 4
      %s149 = int_to_ptr.vmem [resolvable:$true] %s148
      %154 = dma.vmem_to_hbm [thread:$0]  %s149, 256, %s3, [#allocation4], 128, 128, 8
    $region25: #{value_encoder_forward.1} parent=1 // pred_fallthru
      _
    // Predicated region
    $region26: #{value_encoder_forward.1} parent=1 // pred_check
      _
    $region27: #{value_encoder_forward.1} parent=1 // pred_check_branch
      %156 = sbr.rel (0) target = $region29
    $region28: #{value_encoder_forward.1} parent=1 // pred_region
      %157 = dma.done [#allocation4], 256
    $region29: #{value_encoder_forward.1} parent=1 // pred_fallthru
      _
    %158 = vsyncpa [#allocation3], 1
    %159 = vsyncpa [#allocation6], 1
    %160 = vsyncpa [#allocation4], 1

</llo_original>
